<compile_context>
chip_gen: v7x
topology: tpu7x:2x2x1
jax: 0.10.0
libtpu: 0.0.40
codegen_flags: <defaults>
</compile_context>

<pallas_src>
import functools

import jax
import jax.numpy as jnp
from jax.experimental import pallas as pl
from jax.experimental.pallas import tpu as pltpu


def _round_up(n, m):
    return ((n + m - 1) // m) * m


def _mdn_head_kernel(x_ref, w_ref, b_ref, out_ref, *, dx, min_std):
    # x_ref: (TB, IN) compute_dtype; w_ref: (IN, SLABP) compute_dtype;
    # b_ref: (1, SLABP) f32 (tail pad lanes hold -1e30); out_ref: (TB, SLABP).
    x = x_ref[...]

    # Single fused matmul for all three heads, f32 accumulation on the MXU.
    pre = jnp.dot(x, w_ref[...], preferred_element_type=jnp.float32)
    pre = pre + b_ref[...]                      # bias add in f32

    lane = jax.lax.broadcasted_iota(jnp.int32, pre.shape, 1)
    is_std = jnp.logical_and(lane >= dx, lane < 2 * dx)
    is_lg = lane >= 2 * dx                      # logits + tail pad (-1e30 bias)

    # Numerically-stable softplus + min_std (exp/log1p go to the EUP slot).
    sp = jnp.maximum(pre, 0.0) + jnp.log1p(jnp.exp(-jnp.abs(pre))) + min_std

    # log-softmax over the logits lane range; tail pad lanes carry -1e30 from
    # the bias so they contribute exp(-huge)=0 to the sum automatically.
    lg = jnp.where(is_lg, pre, -1e30)
    m = jnp.max(lg, axis=-1, keepdims=True)
    lse = m + jnp.log(jnp.sum(jnp.exp(lg - m), axis=-1, keepdims=True))

    out = jnp.where(is_std, sp, jnp.where(is_lg, pre - lse, pre))
    out_ref[...] = out.astype(out_ref.dtype)


def mdn_head(x, w, b, *, mdn_k, out_n, min_std=1e-2, block_b=1024,
             compute_dtype=jnp.bfloat16, out_dtype=None):
    """MDNHead forward (parameters of the MixtureSameFamily).

    x: (..., in_n) f32
    w: (in_n, mdn_k + 2*mdn_k*out_n) f32  (transposed torch Linear weight)
    b: (mdn_k + 2*mdn_k*out_n,) f32
    returns (mu (..., mdn_k, out_n), std (..., mdn_k, out_n), logits (..., mdn_k))
    with logits already log-softmax normalized (== thd.Categorical(...).logits).
    """
    lead = x.shape[:-1]
    in_n = x.shape[-1]
    dx = mdn_k * out_n
    width = 2 * dx + mdn_k
    assert w.shape == (in_n, width) and b.shape == (width,)

    out_dtype = x.dtype if out_dtype is None else out_dtype

    # --- host-side prep: one lane-dense padded weight slab + f32 bias -------
    SLABP = _round_up(width, 128)
    w_pad = jnp.pad(w, ((0, 0), (0, SLABP - width))).astype(compute_dtype)
    b_pad = jnp.pad(b.astype(jnp.float32), (0, SLABP - width),
                    constant_values=-1e30).reshape(1, SLABP)

    x2 = x.reshape(-1, in_n).astype(compute_dtype)
    B = x2.shape[0]

    # --- VMEM budgeting (counts resident weights/bias, chip-aware limit) ----
    c_item = jnp.finfo(compute_dtype).bits // 8
    o_item = jnp.finfo(out_dtype).bits // 8
    try:
        vmem_cap = pltpu.get_tpu_info().vmem_capacity_bytes
    except Exception:  # pragma: no cover - conservative fallback
        vmem_cap = 64 * 1024 * 1024
    # ~48 MiB on v7x (64 MiB part), ~96 MiB on v5e/v6e (128 MiB parts).
    vmem_limit = int(min(vmem_cap * 3 // 4, 96 * 1024 * 1024))
    resident = 2 * (in_n * SLABP * c_item) + 2 * (SLABP * 4)   # weights + bias (x2 bufs)
    budget = vmem_limit - resident - (2 << 20)                  # compiler headroom
    bytes_per_row = 2 * (in_n * c_item) + 2 * (SLABP * o_item)  # double-buffered x + out
    tb_cap = max(16, (budget // max(bytes_per_row, 1)) // 16 * 16)

    # Batch tile: multiple of 16 (bf16 sublane packing), as large as the
    # budget/batch allow, but always >= 2 grid steps when B permits so the
    # "parallel" axis can shard across v7x's two TensorCores.
    B16 = _round_up(max(B, 1), 16)
    TB = max(16, min(block_b, tb_cap, B16))
    if TB >= B16 and B16 >= 32:
        TB = _round_up(B16 // 2, 16)
    Bp = _round_up(B, TB)
    if Bp != B:
        x2 = jnp.pad(x2, ((0, Bp - B), (0, 0)))

    grid = (Bp // TB,)
    kernel = functools.partial(_mdn_head_kernel, dx=dx, min_std=float(min_std))

    slab = pl.pallas_call(
        kernel,
        out_shape=jax.ShapeDtypeStruct((Bp, SLABP), out_dtype),
        grid_spec=pltpu.PrefetchScalarGridSpec(
            num_scalar_prefetch=0,
            grid=grid,
            in_specs=[
                pl.BlockSpec((TB, in_n), lambda i: (i, 0)),     # x: tiled over batch
                pl.BlockSpec((in_n, SLABP), lambda i: (0, 0)),  # resident weight slab
                pl.BlockSpec((1, SLABP), lambda i: (0, 0)),     # resident f32 bias
            ],
            out_specs=pl.BlockSpec((TB, SLABP), lambda i: (i, 0)),
        ),
        compiler_params=pltpu.CompilerParams(
            dimension_semantics=("parallel",),   # batch tiles are independent
            vmem_limit_bytes=vmem_limit,
        ),
    )(x2, w_pad, b_pad)

    slab = slab[:B].astype(jnp.float32)
    mu = slab[:, :dx].reshape(*lead, mdn_k, out_n)
    std = slab[:, dx:2 * dx].reshape(*lead, mdn_k, out_n)
    logits = slab[:, 2 * dx:2 * dx + mdn_k].reshape(*lead, mdn_k)
    return mu, std, logits


if __name__ == "__main__":
    # Small shapes consistent with the module: batch=16, in_n=32, out_n=8, K=4.
    B, in_n, out_n, mdn_k = 16, 32, 8, 4
    min_std = 0.01
    dx = mdn_k * out_n
    width = mdn_k + 2 * dx  # 68

    key = jax.random.PRNGKey(0)
    kx, kw, kb = jax.random.split(key, 3)

    # Deterministic synthetic parameters (PyTorch Linear-style uniform init).
    bound = 1.0 / jnp.sqrt(jnp.float32(in_n))
    w = jax.random.uniform(kw, (in_n, width), jnp.float32, -bound, bound)
    b = jax.random.uniform(kb, (width,), jnp.float32, -bound, bound)
    x = jax.random.normal(kx, (B, in_n), jnp.float32)

    # Reference in plain JAX (same semantics as the torch module; Categorical
    # log-normalized logits).
    out = x @ w + b
    ref_mu = out[:, :dx].reshape(B, mdn_k, out_n)
    ref_std = (jax.nn.softplus(out[:, dx:2 * dx]) + min_std).reshape(B, mdn_k, out_n)
    ref_lg_raw = out[:, 2 * dx:]
    ref_lg = ref_lg_raw - jax.scipy.special.logsumexp(
        ref_lg_raw, axis=-1, keepdims=True)

    # Exact f32 path.
    mu, std, logits = mdn_head(x, w, b, mdn_k=mdn_k, out_n=out_n,
                               min_std=min_std, compute_dtype=jnp.float32)
    mu, std, logits = jax.block_until_ready((mu, std, logits))
    assert jnp.allclose(mu, ref_mu, atol=1e-5, rtol=1e-5), "mu mismatch (f32)"
    assert jnp.allclose(std, ref_std, atol=1e-5, rtol=1e-5), "std mismatch (f32)"
    assert jnp.allclose(logits, ref_lg, atol=1e-5, rtol=1e-5), "logits mismatch (f32)"

    # bf16 fast path (halved x/weight DMA bytes; f32 accumulation + f32 math).
    mu_b, std_b, lg_b = mdn_head(x, w, b, mdn_k=mdn_k, out_n=out_n,
                                 min_std=min_std, compute_dtype=jnp.bfloat16)
    mu_b, std_b, lg_b = jax.block_until_ready((mu_b, std_b, lg_b))
    assert jnp.allclose(mu_b, ref_mu, atol=3e-2, rtol=3e-2), "mu mismatch (bf16)"
    assert jnp.allclose(std_b, ref_std, atol=3e-2, rtol=3e-2), "std mismatch (bf16)"
    assert jnp.allclose(lg_b, ref_lg, atol=3e-2, rtol=3e-2), "logits mismatch (bf16)"

    print("KERNEL_OK")
</pallas_src>

<mosaic_0001>
module attributes {stable_mosaic.version = 11 : i64} {
  func.func @_mdn_head_kernel(%arg0: i32, %arg1: memref<16x32xf32, #tpu.memory_space<vmem>>, %arg2: memref<32x128xf32, #tpu.memory_space<vmem>>, %arg3: memref<1x128xf32, #tpu.memory_space<vmem>>, %arg4: memref<16x128xf32, #tpu.memory_space<vmem>>) attributes {dimension_semantics = [#tpu.dimension_semantics<parallel>], iteration_bounds = array<i64: 1>, scalar_prefetch = 0 : i64, scratch_operands = 0 : i64, tpu.core_type = #tpu.core_type<tc>, window_params = [{transform_indices = @transform_0, window_bounds = array<i64: 16, 32>}, {pipeline_mode = #tpu.pipeline_mode<synchronous>, transform_indices = @transform_1, window_bounds = array<i64: 32, 128>}, {pipeline_mode = #tpu.pipeline_mode<synchronous>, transform_indices = @transform_2, window_bounds = array<i64: 1, 128>}, {transform_indices = @transform_3, window_bounds = array<i64: 16, 128>}]} {
    %c0 = arith.constant 0 : index
    %c0_0 = arith.constant 0 : index
    %0 = vector.load %arg1[%c0, %c0_0] : memref<16x32xf32, #tpu.memory_space<vmem>>, vector<16x32xf32>
    %c0_1 = arith.constant 0 : index
    %c0_2 = arith.constant 0 : index
    %1 = vector.load %arg2[%c0_1, %c0_2] : memref<32x128xf32, #tpu.memory_space<vmem>>, vector<32x128xf32>
    %cst = arith.constant dense<0.000000e+00> : vector<16x128xf32>
    %2 = tpu.matmul %0, %1, %cst {dimension_numbers = #tpu.dot_dimension_numbers<[1], [0], [0], [1], [0, 0, 1, 1], [], []>} : vector<16x32xf32>, vector<32x128xf32>, vector<16x128xf32> -> vector<16x128xf32>
    %c0_3 = arith.constant 0 : index
    %c0_4 = arith.constant 0 : index
    %3 = vector.load %arg3[%c0_3, %c0_4] : memref<1x128xf32, #tpu.memory_space<vmem>>, vector<1x128xf32>
    %4 = vector.broadcast %3 : vector<1x128xf32> to vector<16x128xf32>
    %5 = arith.addf %2, %4 : vector<16x128xf32>
    %6 = tpu.iota {dimensions = array<i32: 1>} : vector<16x128xi32>
    %c32_i32 = arith.constant 32 : i32
    %7 = vector.broadcast %c32_i32 : i32 to vector<16x128xi32>
    %8 = arith.cmpi sge, %6, %7 : vector<16x128xi32>
    %c64_i32 = arith.constant 64 : i32
    %9 = vector.broadcast %c64_i32 : i32 to vector<16x128xi32>
    %10 = arith.cmpi slt, %6, %9 : vector<16x128xi32>
    %11 = arith.andi %8, %10 : vector<16x128xi1>
    %c64_i32_5 = arith.constant 64 : i32
    %12 = vector.broadcast %c64_i32_5 : i32 to vector<16x128xi32>
    %13 = arith.cmpi sge, %6, %12 : vector<16x128xi32>
    %cst_6 = arith.constant 0.000000e+00 : f32
    %14 = vector.broadcast %cst_6 : f32 to vector<16x128xf32>
    %15 = arith.maximumf %5, %14 : vector<16x128xf32>
    %16 = math.absf %5 : vector<16x128xf32>
    %cst_7 = arith.constant 0.000000e+00 : f32
    %17 = vector.broadcast %cst_7 : f32 to vector<16x128xf32>
    %18 = arith.subf %17, %16 : vector<16x128xf32>
    %19 = math.exp %18 : vector<16x128xf32>
    %20 = math.log1p %19 : vector<16x128xf32>
    %21 = arith.addf %15, %20 : vector<16x128xf32>
    %cst_8 = arith.constant 0.00999999977 : f32
    %22 = vector.broadcast %cst_8 : f32 to vector<16x128xf32>
    %23 = arith.addf %21, %22 : vector<16x128xf32>
    %cst_9 = arith.constant -1.000000e+30 : f32
    %24 = vector.broadcast %cst_9 : f32 to vector<16x128xf32>
    %25 = arith.select %13, %5, %24 : vector<16x128xi1>, vector<16x128xf32>
    %cst_10 = arith.constant dense<0xFF800000> : vector<16xf32>
    %26 = vector.multi_reduction <maximumf>, %25, %cst_10 [1] : vector<16x128xf32> to vector<16xf32>
    %27 = vector.shape_cast %26 : vector<16xf32> to vector<16x1xf32>
    %28 = vector.broadcast %27 : vector<16x1xf32> to vector<16x128xf32>
    %29 = arith.subf %25, %28 : vector<16x128xf32>
    %30 = math.exp %29 : vector<16x128xf32>
    %cst_11 = arith.constant dense<0.000000e+00> : vector<16xf32>
    %31 = vector.multi_reduction <add>, %30, %cst_11 [1] : vector<16x128xf32> to vector<16xf32>
    %32 = vector.shape_cast %31 : vector<16xf32> to vector<16x1xf32>
    %33 = math.log %32 : vector<16x1xf32>
    %34 = arith.addf %27, %33 : vector<16x1xf32>
    %35 = vector.broadcast %34 : vector<16x1xf32> to vector<16x128xf32>
    %36 = arith.subf %5, %35 : vector<16x128xf32>
    %37 = arith.select %13, %36, %5 : vector<16x128xi1>, vector<16x128xf32>
    %38 = arith.select %11, %23, %37 : vector<16x128xi1>, vector<16x128xf32>
    %c0_12 = arith.constant 0 : index
    %c0_13 = arith.constant 0 : index
    %39 = vector.load %arg4[%c0_12, %c0_13] : memref<16x128xf32, #tpu.memory_space<vmem>>, vector<16x128xf32>
    tpu.vector_store %arg4[%c0_12, %c0_13], %38 {strides = array<i32>} : memref<16x128xf32, #tpu.memory_space<vmem>>, vector<16x128xf32>,
    return
  }
  func.func @transform_0(%arg0: i32) -> (i32, i32) {
    %c0_i32 = arith.constant 0 : i32
    %c0_i32_0 = arith.constant 0 : i32
    return %arg0, %c0_i32 : i32, i32
  }
  func.func @transform_1(%arg0: i32) -> (i32, i32) {
    %c0_i32 = arith.constant 0 : i32
    %c0_i32_0 = arith.constant 0 : i32
    %c0_i32_1 = arith.constant 0 : i32
    return %c0_i32, %c0_i32_0 : i32, i32
  }
  func.func @transform_2(%arg0: i32) -> (i32, i32) {
    %c0_i32 = arith.constant 0 : i32
    %c0_i32_0 = arith.constant 0 : i32
    %c0_i32_1 = arith.constant 0 : i32
    return %c0_i32, %c0_i32_0 : i32, i32
  }
  func.func @transform_3(%arg0: i32) -> (i32, i32) {
    %c0_i32 = arith.constant 0 : i32
    %c0_i32_0 = arith.constant 0 : i32
    return %arg0, %c0_i32 : i32, i32
  }
}

</mosaic_0001>

<llo_original>
// kernel: tpu_custom_call.1
$region0: #{tpu_custom_call.1}
  #allocation0 [shape = 'u32[]', space=smem, size = 0x4, offset = 0x4, fixed_abs, tag = 'smem constant byte address 0x4 - core index']
  #allocation1 [shape = 'u32[144,128]{1,0:T(1,128)}', space=vmem, size = 0x12000, scoped, tag = 'internal scratch']
  %s0 = inlined_call_operand.hbm [shape: f32[16,32], index: 0, kind: input, shape index: {}]
  %s1 = inlined_call_operand.hbm [shape: f32[32,128], index: 1, kind: input, shape index: {}]
  %s2 = inlined_call_operand.vmem [shape: f32[1,128], index: 2, kind: input, shape index: {}]
  %s3 = inlined_call_operand.hbm [shape: f32[16,128], index: 3, kind: output, shape index: {}]
  %s4 = sld [smem:[#allocation0]]
  $region30: #{tpu_custom_call.1} parent=0
    _
  %s6 = ssub.s32 1, %s4
  %s7 = scalar_select 0, %s6, %s4
  $region1: #{tpu_custom_call.1} parent=0
    #allocation2 [shape = 'u8[8192]{0}', space=vmem, size = 0x2000, scoped, tag = 'input window, operand 0, single buffered']
    #allocation3 [shape = 's32[1]{0}', space=sflag, size = 0x4, scoped, tag = 'scoped memory for tpu_custom_call.1']
    #allocation4 [shape = 's32[1]{0}', space=sflag, size = 0x4, scoped, tag = 'scoped memory for tpu_custom_call.1']
    #allocation5 [shape = 'u8[16384]{0}', space=vmem, size = 0x4000, scoped, tag = 'input window, operand 1, single buffered']
    #allocation6 [shape = 's32[1]{0}', space=sflag, size = 0x4, scoped, tag = 'scoped memory for tpu_custom_call.1']
    #allocation7 [shape = 'u8[8192]{0}', space=vmem, size = 0x2000, scoped, tag = 'output window, operand 0, single buffered']
    %8 = vsyncpa [#allocation3], 0
    %9 = vsyncpa [#allocation6], 0
    %10 = vsyncpa [#allocation4], 0
    // Predicated region
    $region2: #{tpu_custom_call.1} parent=1 // pred_check
      _
    $region3: #{tpu_custom_call.1} parent=1 // pred_check_branch
      %12 = sbr.rel (0) target = $region5
    $region4: #{tpu_custom_call.1} parent=1 // pred_region
      %s14 = ssub.s32 256, 256
      %15 = vsyncadd [#allocation3], %s14
      %s16 = sshll.u32 [#allocation2], 4
      %s17 = int_to_ptr.vmem [resolvable:$true] %s16
      %22 = dma.hbm_to_vmem [thread:$0]  %s0, 256, %s17, [#allocation3], 128, 128, 8
    $region5: #{tpu_custom_call.1} parent=1 // pred_fallthru
      _
    // Predicated region
    $region6: #{tpu_custom_call.1} parent=1 // pred_check
      _
    $region7: #{tpu_custom_call.1} parent=1 // pred_check_branch
      %24 = sbr.rel (0) target = $region9
    $region8: #{tpu_custom_call.1} parent=1 // pred_region
      %s26 = ssub.s32 512, 512
      %27 = vsyncadd [#allocation6], %s26
      %s28 = sshll.u32 [#allocation5], 4
      %s29 = int_to_ptr.vmem [resolvable:$true] %s28
      %34 = dma.hbm_to_vmem [thread:$0]  %s1, 512, %s29, [#allocation6], 128, 128, 8
    $region9: #{tpu_custom_call.1} parent=1 // pred_fallthru
      _
    // Predicated region
    $region10: #{tpu_custom_call.1} parent=1 // pred_check
      _
    $region11: #{tpu_custom_call.1} parent=1 // pred_check_branch
      %36 = sbr.rel (0) target = $region13
    $region12: #{tpu_custom_call.1} parent=1 // pred_region
      _
    $region13: #{tpu_custom_call.1} parent=1 // pred_fallthru
      _
    // Predicated region
    $region14: #{tpu_custom_call.1} parent=1 // pred_check
      _
    $region15: #{tpu_custom_call.1} parent=1 // pred_check_branch
      %38 = sbr.rel (0) target = $region17
    $region16: #{tpu_custom_call.1} parent=1 // pred_region
      %39 = dma.done [#allocation3], 256
    $region17: #{tpu_custom_call.1} parent=1 // pred_fallthru
      _
    // Predicated region
    $region18: #{tpu_custom_call.1} parent=1 // pred_check
      _
    $region19: #{tpu_custom_call.1} parent=1 // pred_check_branch
      %41 = sbr.rel (0) target = $region21
    $region20: #{tpu_custom_call.1} parent=1 // pred_region
      %42 = dma.done [#allocation6], 512
    $region21: #{tpu_custom_call.1} parent=1 // pred_fallthru
      _
    %v43 = vld [vmem:[#allocation2] sm:$0xff]
    %v44 = vld [vmem:[#allocation2 + $0x8] sm:$0xff]
    %v45 = vld [vmem:[#allocation5] sm:$0xff]
    %v46 = vld [vmem:[#allocation5 + $0x8] sm:$0xff]
    %v47 = vld [vmem:[#allocation5 + $0x10] sm:$0xff]
    %v48 = vld [vmem:[#allocation5 + $0x18] sm:$0xff]
    %v49 = vld [vmem:[%s2] sm:$0x1]
    %v51 = vlaneseq
    %v52 = vshrl.u32 %v51, 7
    %v53 = vsub.s32 0, %v52
    %v54 = vrot.slane %v49, %v53
    %vm56 = vcmask 261120
    %v58 = vsel %vm56, %v43, 0
    %v61 = vsel %vm56, %v44, 0
    %63 = vmatprep.subr.mxu0 0.0
    %64 = vmatpush1.msra.mxu0 %v45
    %65 = vmatprep.subr.mxu0 0.0
    %66 = vmatpush1.msra.mxu0 %v46
    %67 = vmatprep.subr.mxu0 0.0
    %68 = vmatpush1.msra.mxu0 %v47
    %69 = vmatprep.subr.mxu0 0.0
    %70 = vmatpush1.msra.mxu0 %v48
    %71 = vmatprep.subr.mxu0 0.0
    %72 = vmatpush1.msra.mxu0 0.0
    %73 = vmatprep.subr.mxu0 0.0
    %74 = vmatpush1.msra.mxu0 0.0
    %75 = vmatprep.subr.mxu0 0.0
    %76 = vmatpush1.msra.mxu0 0.0
    %77 = vmatprep.subr.mxu0 0.0
    %78 = vmatpush1.msra.mxu0 0.0
    %79 = vmatprep.subr.mxu0 0.0
    %80 = vmatpush1.msra.mxu0 0.0
    %81 = vmatprep.subr.mxu0 0.0
    %82 = vmatpush1.msra.mxu0 0.0
    %83 = vmatprep.subr.mxu0 0.0
    %84 = vmatpush1.msra.mxu0 0.0
    %85 = vmatprep.subr.mxu0 0.0
    %86 = vmatpush1.msra.mxu0 0.0
    %87 = vmatprep.subr.mxu0 0.0
    %88 = vmatpush1.msra.mxu0 0.0
    %89 = vmatprep.subr.mxu0 0.0
    %90 = vmatpush1.msra.mxu0 0.0
    %91 = vmatprep.subr.mxu0 0.0
    %92 = vmatpush1.msra.mxu0 0.0
    %93 = vmatprep.subr.mxu0 0.0
    %94 = vmatpush1.msra.mxu0 0.0
    %95 = vmatprep.subr.mxu0 0.0
    %96 = vmatpush1.msra.mxu0 0.0
    %97 = vmatprep.subr.mxu0 0.0
    %98 = vmatpush1.msra.mxu0 0.0
    %99 = vmatprep.subr.mxu0 0.0
    %100 = vmatpush1.msra.mxu0 0.0
    %101 = vmatprep.subr.mxu0 0.0
    %102 = vmatpush1.msra.mxu0 0.0
    %103 = vmatprep.subr.mxu0 0.0
    %104 = vmatpush1.msra.mxu0 0.0
    %105 = vmatprep.subr.mxu0 0.0
    %106 = vmatpush1.msra.mxu0 0.0
    %107 = vmatprep.subr.mxu0 0.0
    %108 = vmatpush1.msra.mxu0 0.0
    %109 = vmatprep.subr.mxu0 0.0
    %110 = vmatpush1.msra.mxu0 0.0
    %111 = vmatprep.subr.mxu0 0.0
    %112 = vmatpush1.msra.mxu0 0.0
    %113 = vmatprep.subr.mxu0 0.0
    %114 = vmatpush1.msra.mxu0 0.0
    %115 = vmatprep.subr.mxu0 0.0
    %116 = vmatpush1.msra.mxu0 0.0
    %117 = vmatprep.subr.mxu0 0.0
    %118 = vmatpush1.msra.mxu0 0.0
    %119 = vmatprep.subr.mxu0 0.0
    %120 = vmatpush1.msra.mxu0 0.0
    %121 = vmatprep.subr.mxu0 0.0
    %122 = vmatpush1.msra.mxu0 0.0
    %123 = vmatprep.subr.mxu0 0.0
    %124 = vmatpush1.msra.mxu0 0.0
    %125 = vmatprep.subr.mxu0 0.0
    %126 = vmatpush1.msra.mxu0 0.0
    %127 = vmatprep.mubr.f32.mxu0 0.0
    %128 = vmatmul.mubr.f32.gmra.mrb[0].mxu0 %v58
    %v129 = vpop.f32.mrb[0].mxu0
    %v130 = vadd.f32 %v54, %v129
    %v131 = vpop.f32.mrb[0].mxu0
    %132 = vmatprep.mubr.f32.mxu0 0.0
    %133 = vmatmul.mubr.f32.gmra.mrb[0].mxu0 %v61
    %v134 = vpop.f32.mrb[0].mxu0
    %v135 = vadd.f32 %v54, %v134
    %v136 = vpop.f32.mrb[0].mxu0
    %137 = vdwg.mxu0
    %v138 = vlaneseq
    %v139 = vand.u32 %v138, 127
    %vm140 = vcmp.ge.s32.totalorder %v139, 32
    %vm141 = vcmp.lt.s32.totalorder %v139, 64
    %vm142 = vmand %vm140, %vm141
    %vm143 = vcmp.ge.s32.totalorder %v139, 64
    %v144 = vmax.f32 %v130, 0.0
    %v145 = vmax.f32 %v135, 0.0
    %v146 = vand.u32 2147483647, %v130
    %v147 = vand.u32 2147483647, %v135
    %v148 = vsub.f32 0.0, %v146
    %v149 = vsub.f32 0.0, %v147
    %v150 = vmul.f32 %v148, 1.442695
    %v151 = vpow.pop %v150
    %v152 = vmul.f32 %v149, 1.442695
    %v153 = vpow.pop %v152
    %v154 = vadd.f32 %v151, 1.0
    %v155 = vlog2.pop %v154
    %v156 = vmul.f32 %v155, 0.6931472
    %v157 = vmul.f32 -0.5, %v151
    %v158 = vadd.f32 %v157, 1.0
    %v159 = vmul.f32 %v158, %v151
    %v160 = vand.u32 2147483647, %v151
    %vm161 = vcmp.lt.f32.partialorder %v160, 0.0004427343
    %v162 = vsel %vm161, %v159, %v156
    %v163 = vadd.f32 %v153, 1.0
    %v164 = vlog2.pop %v163
    %v165 = vmul.f32 %v164, 0.6931472
    %v166 = vmul.f32 -0.5, %v153
    %v167 = vadd.f32 %v166, 1.0
    %v168 = vmul.f32 %v167, %v153
    %v169 = vand.u32 2147483647, %v153
    %vm170 = vcmp.lt.f32.partialorder %v169, 0.0004427343
    %v171 = vsel %vm170, %v168, %v165
    %v172 = vadd.f32 %v144, %v162
    %v173 = vadd.f32 %v145, %v171
    %v174 = vadd.f32 %v172, 0.01
    %v175 = vadd.f32 %v173, 0.01
    %v176 = vsel %vm143, %v130, -1e+30
    %v177 = vsel %vm143, %v135, -1e+30
    %178 = vmax.xlane.f32.xlu0 %v176
    %v179 = vpop.xlane.xlu0 %178
    %180 = vmax.xlane.f32.xlu0 %v177
    %v181 = vpop.xlane.xlu0 %180
    %v182 = vsub.f32 %v176, %v179
    %v183 = vsub.f32 %v177, %v181
    %v184 = vmul.f32 %v182, 1.442695
    %v185 = vpow.pop %v184
    %v186 = vmul.f32 %v183, 1.442695
    %v187 = vpow.pop %v186
    %188 = vadd.xlane.f32.xlu0 %v185
    %v189 = vpop.xlane.xlu0 %188
    %190 = vadd.xlane.f32.xlu0 %v187
    %v191 = vpop.xlane.xlu0 %190
    %v192 = vlog2.pop %v189
    %v193 = vmul.f32 %v192, 0.6931472
    %v194 = vlog2.pop %v191
    %v195 = vmul.f32 %v194, 0.6931472
    %v196 = vadd.f32 %v179, %v193
    %v197 = vadd.f32 %v181, %v195
    %v198 = vsub.f32 %v130, %v196
    %v199 = vsub.f32 %v135, %v197
    %v200 = vsel %vm143, %v198, %v130
    %v201 = vsel %vm143, %v199, %v135
    %v202 = vsel %vm142, %v174, %v200
    %v203 = vsel %vm142, %v175, %v201
    %204 = vst [vmem:[#allocation7] sm:$0xff] %v202
    %205 = vst [vmem:[#allocation7 + $0x8] sm:$0xff] %v203
    // Predicated region
    $region22: #{tpu_custom_call.1} parent=1 // pred_check
      _
    $region23: #{tpu_custom_call.1} parent=1 // pred_check_branch
      %207 = sbr.rel (0) target = $region25
    $region24: #{tpu_custom_call.1} parent=1 // pred_region
      %s209 = ssub.s32 256, 256
      %210 = vsyncadd [#allocation4], %s209
      %s211 = sshll.u32 [#allocation7], 4
      %s212 = int_to_ptr.vmem [resolvable:$true] %s211
      %217 = dma.vmem_to_hbm [thread:$0]  %s212, 256, %s3, [#allocation4], 128, 128, 8
    $region25: #{tpu_custom_call.1} parent=1 // pred_fallthru
      _
    // Predicated region
    $region26: #{tpu_custom_call.1} parent=1 // pred_check
      _
    $region27: #{tpu_custom_call.1} parent=1 // pred_check_branch
      %219 = sbr.rel (0) target = $region29
    $region28: #{tpu_custom_call.1} parent=1 // pred_region
      %220 = dma.done [#allocation4], 256
    $region29: #{tpu_custom_call.1} parent=1 // pred_fallthru
      _
    %221 = vsyncpa [#allocation3], 1
    %222 = vsyncpa [#allocation6], 1
    %223 = vsyncpa [#allocation4], 1

</llo_original>
